<compile_context>
chip_gen: v7x
topology: tpu7x:2x2x1
jax: 0.10.0
libtpu: 0.0.40
codegen_flags: <defaults>
</compile_context>

<pallas_src>
import jax
import jax.numpy as jnp
from jax.experimental import pallas as pl
from jax.experimental.pallas import tpu as pltpu


def _round_up(x, m):
    return (x + m - 1) // m * m


def _pick_lane_tile(M, F, H, in_itemsize):
    """Lanes (flattened B*N rows) processed per grid step.

    The VMEM model is (8,128)-padding aware: sublane dims round up to 8, the
    lane dim (TM) is a multiple of 128 by construction."""
    Fp = _round_up(F, 8)
    Hp = _round_up(H, 8)
    per_lane = (2 * Fp * in_itemsize      # feat block, double-buffered
                + 2 * 8 * 4               # (1,TM) out block pads to 8 sublanes, 2 bufs
                + 4 * Hp * 4)             # live f32 activation copies (+ cast slack)
    budget = 24 * 1024 * 1024             # working-set target, safe on v5e/v6e/v7x
    tm = max(128, (budget // per_lane) // 128 * 128)
    tm = min(tm, 4096)                    # step overhead (~0.35us) already amortized
    if M > 128:
        # keep >= 2 grid steps so the "parallel" axis can shard over v7x's 2 cores
        tm = min(tm, _round_up((M + 1) // 2, 128))
    return min(tm, _round_up(M, 128))


def _pack_params(params, F, H, layer_num, w_dtype):
    """Pack all Linear weights (transposed) into one 8-row-aligned (R, WP)
    operand, fold the output layer into a row vector, and pack the biases of
    the ReLU layers as (H,) columns (added in f32 inside the kernel)."""
    WP = max(F, H)

    def seg(mat):
        r, c = mat.shape
        out = jnp.zeros((_round_up(r, 8), WP), jnp.float32)
        return out.at[:r, :c].set(mat.astype(jnp.float32))

    segs, offs, r = [], [], 0
    s0 = seg(params[0][0].T)                       # layer 0: (F,H) -> (H,F)
    segs.append(s0); offs.append(r); r += s0.shape[0]
    for i in range(1, 1 + layer_num):              # hidden: (H,H) -> (H,H)
        si = seg(params[i][0].T)
        segs.append(si); offs.append(r); r += si.shape[0]
    # output layer folded to a row vector: v[j] = sum_o W_out[j, o]
    sv = seg(params[-1][0].sum(axis=1).reshape(1, -1))
    segs.append(sv); offs.append(r); r += sv.shape[0]
    wpack = jnp.concatenate(segs, axis=0).astype(w_dtype)

    bpack = jnp.zeros((_round_up(H, 8), 1 + layer_num), jnp.float32)
    for j in range(1 + layer_num):
        bpack = bpack.at[:H, j].set(params[j][1].reshape(-1).astype(jnp.float32))
    b_out_sum = params[-1][1].astype(jnp.float32).sum()
    return wpack, bpack, b_out_sum, offs


def _make_kernel(layer_num, F, H, offs, use_bf16):
    cdt = jnp.bfloat16 if use_bf16 else jnp.float32

    def mm(a, b):
        return jnp.dot(a, b, preferred_element_type=jnp.float32)

    def kernel(featT_ref, w_ref, b_ref, o_ref):
        xT = featT_ref[...]                                      # (F, TM)
        # layer 0: relu(W0^T @ feat^T + b0)
        x = mm(w_ref[offs[0]:offs[0] + H, 0:F], xT)              # (H, TM) f32
        x = jnp.maximum(x + b_ref[0:H, 0:1], 0.0)
        # hidden ReLU layers
        for i in range(layer_num):
            woff = offs[1 + i]
            x = mm(w_ref[woff:woff + H, 0:H], x.astype(cdt))
            x = jnp.maximum(x + b_ref[0:H, i + 1:i + 2], 0.0)
        # folded output layer: s = v @ x (8-row padded segment, use row 0);
        # its scalar bias is added in the wrapper.
        voff = offs[-1]
        s8 = mm(w_ref[voff:voff + 8, 0:H], x.astype(cdt))        # (8, TM)
        o_ref[...] = s8[0:1, :].astype(o_ref.dtype)              # lane-dense store

    return kernel


def sub_equi_mlp_forward(z, h, params, layer_num, g=None, use_bf16=False):
    """params: list of (W, b) pairs (x @ W + b orientation), length layer_num + 2."""
    B, N, D = z.shape
    Dh = h.shape[-1]
    H = params[0][0].shape[-1]
    F = 1 + Dh
    assert params[0][0].shape[0] == F, "MLP input dim must be 1 + h feature dim"
    if g is None:
        g = jnp.array([0.0, 0.0, -1.0], jnp.float32)

    in_dtype = jnp.bfloat16 if use_bf16 else jnp.float32
    itemsize = jnp.dtype(in_dtype).itemsize

    # ---- XLA-side glue: diagonal features, transposed & lane-padded --------
    g_rep = jnp.broadcast_to(g.astype(jnp.float32)[None, None, :], (B, N, g.shape[0]))
    aug = jnp.concatenate([z.astype(jnp.float32), g_rep], axis=-1)     # (B,N,D+3)
    ed = jnp.sum(aug * aug, axis=-1, keepdims=True)                    # <aug,aug> (diag)
    feat = jnp.concatenate([ed, h.astype(jnp.float32)], axis=-1)       # (B,N,F)

    M = B * N
    TM = _pick_lane_tile(M, F, H, itemsize)
    M_pad = _round_up(M, TM)
    featT = feat.reshape(M, F).T                                       # (F, M)
    featT = jnp.pad(featT, ((0, 0), (0, M_pad - M))).astype(in_dtype)

    wpack, bpack, b_out_sum, offs = _pack_params(params, F, H, layer_num, in_dtype)

    # (8,128)-aware working-set estimate -> explicit scoped-VMEM limit.
    Fp, Hp = _round_up(F, 8), _round_up(H, 8)
    ws = (2 * Fp * TM * itemsize + 2 * 8 * TM * 4 + 4 * Hp * TM * 4
          + 2 * int(wpack.size) * itemsize + 2 * int(bpack.size) * 4)
    vmem_limit = int(min(48 * 2**20, max(32 * 2**20, _round_up(2 * ws, 2**20))))

    grid = (M_pad // TM,)
    kernel = _make_kernel(layer_num, F, H, offs, use_bf16)

    s = pl.pallas_call(
        kernel,
        out_shape=jax.ShapeDtypeStruct((1, M_pad), jnp.float32),
        grid_spec=pltpu.PrefetchScalarGridSpec(
            num_scalar_prefetch=0,
            grid=grid,
            in_specs=[
                pl.BlockSpec((F, TM), lambda i: (0, i)),
                # constant index_map: single logical block, no per-step re-fetch
                pl.BlockSpec(wpack.shape, lambda i: (0, 0)),
                pl.BlockSpec(bpack.shape, lambda i: (0, 0)),
            ],
            out_specs=pl.BlockSpec((1, TM), lambda i: (0, i)),
        ),
        compiler_params=pltpu.CompilerParams(
            dimension_semantics=("parallel",),
            vmem_limit_bytes=vmem_limit),
    )(featT, wpack, bpack)

    # s[b,n] = sum_o mat[b,n,n,o];  out[b,n,d] = s[b,n] * sum_m z[b,m,d]
    s = s[0, :M].reshape(B, N) + b_out_sum
    zsum = jnp.sum(z.astype(jnp.float32), axis=1, keepdims=True)       # (B,1,D)
    return s[..., None] * zsum


def sub_equi_mlp_reference(z, h, params, g):
    """Pure-JAX mirror of the full PyTorch forward (builds the whole pair grid)."""
    B, N, D = z.shape
    g_rep = jnp.broadcast_to(g[None, None, :], (B, N, g.shape[0]))
    aug = jnp.concatenate([z, g_rep], axis=-1)
    expat = jnp.einsum('bnd,bmd->bnm', aug, aug)[..., None]            # (B,N,N,1)
    h_rep = jnp.broadcast_to(h[:, None, :, :], (B, N, N, h.shape[-1]))
    x = jnp.concatenate([expat, h_rep], axis=-1)                       # (B,N,N,1+Dh)
    n_layers = len(params)
    for i, (w, b) in enumerate(params):
        x = x @ w + b
        if i < n_layers - 1:
            x = jax.nn.relu(x)
    mat = x                                                            # (B,N,N,H)
    idx = jnp.arange(N)
    mat_diag = mat[:, idx, idx, :]                                     # mat[b,n,n,:]
    return jnp.einsum('bno,bmd->bnd', mat_diag, z)                     # == 'bnno,bmd->bnd'


if __name__ == "__main__":
    B, N, D = 2, 8, 3
    hidden_dim = 32
    layer_num = 2
    Dh = 15
    input_dim = 1 + Dh  # MLP input = [expat scalar, h features]

    key = jax.random.PRNGKey(0)
    kz, kh, kp = jax.random.split(key, 3)
    z = jax.random.normal(kz, (B, N, D), jnp.float32)
    h = jax.random.normal(kh, (B, N, Dh), jnp.float32)

    # Deterministic Linear-layer init (PyTorch-style uniform).
    dims = [input_dim] + [hidden_dim] * (layer_num + 2)
    params = []
    for i in range(len(dims) - 1):
        kp, kw, kb = jax.random.split(kp, 3)
        bound = 1.0 / (dims[i] ** 0.5)
        W = jax.random.uniform(kw, (dims[i], dims[i + 1]), jnp.float32, -bound, bound)
        b = jax.random.uniform(kb, (1, dims[i + 1]), jnp.float32, -bound, bound)
        params.append((W, b))

    g = jnp.array([0.0, 0.0, -1.0], jnp.float32)

    # f32 path, small batch (single grid step)
    out = jax.block_until_ready(sub_equi_mlp_forward(z, h, params, layer_num, g=g))
    ref = sub_equi_mlp_reference(z, h, params, g)
    assert out.shape == (B, N, D)
    err = jnp.max(jnp.abs(out - ref))
    assert jnp.allclose(out, ref, rtol=1e-4, atol=1e-3), f"max abs err {err}"

    # f32 path, larger batch -> multi-step, megacore-friendly grid (>= 2 steps)
    B2 = 64
    kz2, kh2 = jax.random.split(jax.random.PRNGKey(1))
    z2 = jax.random.normal(kz2, (B2, N, D), jnp.float32)
    h2 = jax.random.normal(kh2, (B2, N, Dh), jnp.float32)
    out2 = jax.block_until_ready(sub_equi_mlp_forward(z2, h2, params, layer_num, g=g))
    ref2 = sub_equi_mlp_reference(z2, h2, params, g)
    err2 = jnp.max(jnp.abs(out2 - ref2))
    assert jnp.allclose(out2, ref2, rtol=1e-4, atol=1e-3), f"max abs err {err2}"

    # bf16 fast path (wrapper-side casts, f32 MXU accumulation) — loose sanity bound
    out_bf = jax.block_until_ready(
        sub_equi_mlp_forward(z, h, params, layer_num, g=g, use_bf16=True))
    rel = jnp.linalg.norm(out_bf - ref) / (jnp.linalg.norm(ref) + 1e-6)
    assert rel < 1e-1, f"bf16 relative error {rel}"

    print("KERNEL_OK")
</pallas_src>

<mosaic_0001>
module attributes {stable_mosaic.version = 11 : i64} {
  func.func @kernel(%arg0: i32, %arg1: memref<16x128xf32, #tpu.memory_space<vmem>>, %arg2: memref<104x32xf32, #tpu.memory_space<vmem>>, %arg3: memref<32x3xf32, #tpu.memory_space<vmem>>, %arg4: memref<1x128xf32, #tpu.memory_space<vmem>>) attributes {dimension_semantics = [#tpu.dimension_semantics<parallel>], iteration_bounds = array<i64: 1>, scalar_prefetch = 0 : i64, scratch_operands = 0 : i64, tpu.core_type = #tpu.core_type<tc>, window_params = [{transform_indices = @transform_0, window_bounds = array<i64: 16, 128>}, {pipeline_mode = #tpu.pipeline_mode<synchronous>, transform_indices = @transform_1, window_bounds = array<i64: 104, 32>}, {pipeline_mode = #tpu.pipeline_mode<synchronous>, transform_indices = @transform_2, window_bounds = array<i64: 32, 3>}, {transform_indices = @transform_3, window_bounds = array<i64: 1, 128>}]} {
    %c0 = arith.constant 0 : index
    %c0_0 = arith.constant 0 : index
    %0 = vector.load %arg1[%c0, %c0_0] : memref<16x128xf32, #tpu.memory_space<vmem>>, vector<16x128xf32>
    %c0_1 = arith.constant 0 : index
    %c0_2 = arith.constant 0 : index
    %1 = vector.load %arg2[%c0_1, %c0_2] : memref<104x32xf32, #tpu.memory_space<vmem>>, vector<32x16xf32>
    %cst = arith.constant dense<0.000000e+00> : vector<32x128xf32>
    %2 = tpu.matmul %1, %0, %cst {dimension_numbers = #tpu.dot_dimension_numbers<[1], [0], [0], [1], [0, 0, 1, 1], [], []>} : vector<32x16xf32>, vector<16x128xf32>, vector<32x128xf32> -> vector<32x128xf32>
    %c0_3 = arith.constant 0 : index
    %c0_4 = arith.constant 0 : index
    %3 = vector.load %arg3[%c0_3, %c0_4] : memref<32x3xf32, #tpu.memory_space<vmem>>, vector<32x1xf32>
    %4 = vector.broadcast %3 : vector<32x1xf32> to vector<32x128xf32>
    %5 = arith.addf %2, %4 : vector<32x128xf32>
    %cst_5 = arith.constant 0.000000e+00 : f32
    %6 = vector.broadcast %cst_5 : f32 to vector<32x128xf32>
    %7 = arith.maximumf %5, %6 : vector<32x128xf32>
    %c32 = arith.constant 32 : index
    %c0_6 = arith.constant 0 : index
    %8 = vector.load %arg2[%c32, %c0_6] : memref<104x32xf32, #tpu.memory_space<vmem>>, vector<32x32xf32>
    %cst_7 = arith.constant dense<0.000000e+00> : vector<32x128xf32>
    %9 = tpu.matmul %8, %7, %cst_7 {dimension_numbers = #tpu.dot_dimension_numbers<[1], [0], [0], [1], [0, 0, 1, 1], [], []>} : vector<32x32xf32>, vector<32x128xf32>, vector<32x128xf32> -> vector<32x128xf32>
    %c0_8 = arith.constant 0 : index
    %c1 = arith.constant 1 : index
    %10 = vector.load %arg3[%c0_8, %c1] : memref<32x3xf32, #tpu.memory_space<vmem>>, vector<32x1xf32>
    %11 = vector.broadcast %10 : vector<32x1xf32> to vector<32x128xf32>
    %12 = arith.addf %9, %11 : vector<32x128xf32>
    %cst_9 = arith.constant 0.000000e+00 : f32
    %13 = vector.broadcast %cst_9 : f32 to vector<32x128xf32>
    %14 = arith.maximumf %12, %13 : vector<32x128xf32>
    %c64 = arith.constant 64 : index
    %c0_10 = arith.constant 0 : index
    %15 = vector.load %arg2[%c64, %c0_10] : memref<104x32xf32, #tpu.memory_space<vmem>>, vector<32x32xf32>
    %cst_11 = arith.constant dense<0.000000e+00> : vector<32x128xf32>
    %16 = tpu.matmul %15, %14, %cst_11 {dimension_numbers = #tpu.dot_dimension_numbers<[1], [0], [0], [1], [0, 0, 1, 1], [], []>} : vector<32x32xf32>, vector<32x128xf32>, vector<32x128xf32> -> vector<32x128xf32>
    %c0_12 = arith.constant 0 : index
    %c2 = arith.constant 2 : index
    %17 = vector.load %arg3[%c0_12, %c2] : memref<32x3xf32, #tpu.memory_space<vmem>>, vector<32x1xf32>
    %18 = vector.broadcast %17 : vector<32x1xf32> to vector<32x128xf32>
    %19 = arith.addf %16, %18 : vector<32x128xf32>
    %cst_13 = arith.constant 0.000000e+00 : f32
    %20 = vector.broadcast %cst_13 : f32 to vector<32x128xf32>
    %21 = arith.maximumf %19, %20 : vector<32x128xf32>
    %c96 = arith.constant 96 : index
    %c0_14 = arith.constant 0 : index
    %22 = vector.load %arg2[%c96, %c0_14] : memref<104x32xf32, #tpu.memory_space<vmem>>, vector<8x32xf32>
    %cst_15 = arith.constant dense<0.000000e+00> : vector<8x128xf32>
    %23 = tpu.matmul %22, %21, %cst_15 {dimension_numbers = #tpu.dot_dimension_numbers<[1], [0], [0], [1], [0, 0, 1, 1], [], []>} : vector<8x32xf32>, vector<32x128xf32>, vector<8x128xf32> -> vector<8x128xf32>
    %24 = vector.extract_strided_slice %23 {offsets = [0, 0], sizes = [1, 128], strides = [1, 1]} : vector<8x128xf32> to vector<1x128xf32>
    %c0_16 = arith.constant 0 : index
    %c0_17 = arith.constant 0 : index
    %25 = vector.load %arg4[%c0_16, %c0_17] : memref<1x128xf32, #tpu.memory_space<vmem>>, vector<1x128xf32>
    tpu.vector_store %arg4[%c0_16, %c0_17], %24 {strides = array<i32>} : memref<1x128xf32, #tpu.memory_space<vmem>>, vector<1x128xf32>,
    return
  }
  func.func @transform_0(%arg0: i32) -> (i32, i32) {
    %c0_i32 = arith.constant 0 : i32
    %c0_i32_0 = arith.constant 0 : i32
    return %c0_i32, %arg0 : i32, i32
  }
  func.func @transform_1(%arg0: i32) -> (i32, i32) {
    %c0_i32 = arith.constant 0 : i32
    %c0_i32_0 = arith.constant 0 : i32
    %c0_i32_1 = arith.constant 0 : i32
    return %c0_i32, %c0_i32_0 : i32, i32
  }
  func.func @transform_2(%arg0: i32) -> (i32, i32) {
    %c0_i32 = arith.constant 0 : i32
    %c0_i32_0 = arith.constant 0 : i32
    %c0_i32_1 = arith.constant 0 : i32
    return %c0_i32, %c0_i32_0 : i32, i32
  }
  func.func @transform_3(%arg0: i32) -> (i32, i32) {
    %c0_i32 = arith.constant 0 : i32
    %c0_i32_0 = arith.constant 0 : i32
    return %c0_i32, %arg0 : i32, i32
  }
}

</mosaic_0001>

<llo_original>
// kernel: tpu_custom_call.1
$region0: #{tpu_custom_call.1}
  #allocation0 [shape = 'u32[]', space=smem, size = 0x4, offset = 0x4, fixed_abs, tag = 'smem constant byte address 0x4 - core index']
  #allocation1 [shape = 'u32[144,128]{1,0:T(1,128)}', space=vmem, size = 0x12000, scoped, tag = 'internal scratch']
  %s0 = inlined_call_operand.vmem [shape: f32[16,128], index: 0, kind: input, shape index: {}]
  %s1 = inlined_call_operand.vmem [shape: f32[104,32], index: 1, kind: input, shape index: {}]
  %s2 = inlined_call_operand.vmem [shape: f32[32,3], index: 2, kind: input, shape index: {}]
  %s3 = inlined_call_operand.hbm [shape: f32[1,128], index: 3, kind: output, shape index: {}]
  %s4 = sld [smem:[#allocation0]]
  $region22: #{tpu_custom_call.1} parent=0
    _
  %s6 = ssub.s32 1, %s4
  %s7 = scalar_select 0, %s6, %s4
  $region1: #{tpu_custom_call.1} parent=0
    #allocation2 [shape = 'u8[512]{0}', space=vmem, size = 0x400, scoped, tag = 'output window, operand 0, single buffered']
    #allocation3 [shape = 's32[1]{0}', space=sflag, size = 0x4, scoped, tag = 'scoped memory for tpu_custom_call.1']
    %8 = vsyncpa [#allocation3], 0
    // Predicated region
    $region2: #{tpu_custom_call.1} parent=1 // pred_check
      _
    $region3: #{tpu_custom_call.1} parent=1 // pred_check_branch
      %10 = sbr.rel (0) target = $region5
    $region4: #{tpu_custom_call.1} parent=1 // pred_region
      _
    $region5: #{tpu_custom_call.1} parent=1 // pred_fallthru
      _
    // Predicated region
    $region6: #{tpu_custom_call.1} parent=1 // pred_check
      _
    $region7: #{tpu_custom_call.1} parent=1 // pred_check_branch
      %12 = sbr.rel (0) target = $region9
    $region8: #{tpu_custom_call.1} parent=1 // pred_region
      _
    $region9: #{tpu_custom_call.1} parent=1 // pred_fallthru
      _
    // Predicated region
    $region10: #{tpu_custom_call.1} parent=1 // pred_check
      _
    $region11: #{tpu_custom_call.1} parent=1 // pred_check_branch
      %14 = sbr.rel (0) target = $region13
    $region12: #{tpu_custom_call.1} parent=1 // pred_region
      _
    $region13: #{tpu_custom_call.1} parent=1 // pred_fallthru
      _
    %v15 = vld [vmem:[%s0] sm:$0xff]
    %v16 = vld [vmem:[%s0 + $0x8] sm:$0xff]
    %v17 = vld [vmem:[%s1] sm:$0xff]
    %v18 = vld [vmem:[%s1 + $0x8] sm:$0xff]
    %v19 = vld [vmem:[%s1 + $0x10] sm:$0xff]
    %v20 = vld [vmem:[%s1 + $0x18] sm:$0xff]
    %v21 = vld [vmem:[%s2] sm:$0xff]
    %v22 = vld [vmem:[%s2 + $0x8] sm:$0xff]
    %v23 = vld [vmem:[%s2 + $0x10] sm:$0xff]
    %v24 = vld [vmem:[%s2 + $0x18] sm:$0xff]
    %26 = vset.pattern.permute.xlu0 0
    %27 = vperm.xlu0 %26, %v21
    %v28 = vpop.permute.xlu0 %27
    %31 = vset.pattern.permute.xlu0 0
    %32 = vperm.xlu0 %31, %v22
    %v33 = vpop.permute.xlu0 %32
    %36 = vset.pattern.permute.xlu0 0
    %37 = vperm.xlu0 %36, %v23
    %v38 = vpop.permute.xlu0 %37
    %41 = vset.pattern.permute.xlu0 0
    %42 = vperm.xlu0 %41, %v24
    %v43 = vpop.permute.xlu0 %42
    %vm45 = vcmask 130048
    %v47 = vsel %vm45, %v17, 0
    %v50 = vsel %vm45, %v18, 0
    %v53 = vsel %vm45, %v19, 0
    %v56 = vsel %vm45, %v20, 0
    %58 = vmatprep.subr.mxu0 0.0
    %59 = vmatpush1.msra.mxu0 %v15
    %60 = vmatprep.subr.mxu0 0.0
    %61 = vmatpush1.msra.mxu0 %v16
    %62 = vmatprep.subr.mxu0 0.0
    %63 = vmatpush1.msra.mxu0 0.0
    %64 = vmatprep.subr.mxu0 0.0
    %65 = vmatpush1.msra.mxu0 0.0
    %66 = vmatprep.subr.mxu0 0.0
    %67 = vmatpush1.msra.mxu0 0.0
    %68 = vmatprep.subr.mxu0 0.0
    %69 = vmatpush1.msra.mxu0 0.0
    %70 = vmatprep.subr.mxu0 0.0
    %71 = vmatpush1.msra.mxu0 0.0
    %72 = vmatprep.subr.mxu0 0.0
    %73 = vmatpush1.msra.mxu0 0.0
    %74 = vmatprep.subr.mxu0 0.0
    %75 = vmatpush1.msra.mxu0 0.0
    %76 = vmatprep.subr.mxu0 0.0
    %77 = vmatpush1.msra.mxu0 0.0
    %78 = vmatprep.subr.mxu0 0.0
    %79 = vmatpush1.msra.mxu0 0.0
    %80 = vmatprep.subr.mxu0 0.0
    %81 = vmatpush1.msra.mxu0 0.0
    %82 = vmatprep.subr.mxu0 0.0
    %83 = vmatpush1.msra.mxu0 0.0
    %84 = vmatprep.subr.mxu0 0.0
    %85 = vmatpush1.msra.mxu0 0.0
    %86 = vmatprep.subr.mxu0 0.0
    %87 = vmatpush1.msra.mxu0 0.0
    %88 = vmatprep.subr.mxu0 0.0
    %89 = vmatpush1.msra.mxu0 0.0
    %90 = vmatprep.subr.mxu0 0.0
    %91 = vmatpush1.msra.mxu0 0.0
    %92 = vmatprep.subr.mxu0 0.0
    %93 = vmatpush1.msra.mxu0 0.0
    %94 = vmatprep.subr.mxu0 0.0
    %95 = vmatpush1.msra.mxu0 0.0
    %96 = vmatprep.subr.mxu0 0.0
    %97 = vmatpush1.msra.mxu0 0.0
    %98 = vmatprep.subr.mxu0 0.0
    %99 = vmatpush1.msra.mxu0 0.0
    %100 = vmatprep.subr.mxu0 0.0
    %101 = vmatpush1.msra.mxu0 0.0
    %102 = vmatprep.subr.mxu0 0.0
    %103 = vmatpush1.msra.mxu0 0.0
    %104 = vmatprep.subr.mxu0 0.0
    %105 = vmatpush1.msra.mxu0 0.0
    %106 = vmatprep.subr.mxu0 0.0
    %107 = vmatpush1.msra.mxu0 0.0
    %108 = vmatprep.subr.mxu0 0.0
    %109 = vmatpush1.msra.mxu0 0.0
    %110 = vmatprep.subr.mxu0 0.0
    %111 = vmatpush1.msra.mxu0 0.0
    %112 = vmatprep.subr.mxu0 0.0
    %113 = vmatpush1.msra.mxu0 0.0
    %114 = vmatprep.subr.mxu0 0.0
    %115 = vmatpush1.msra.mxu0 0.0
    %116 = vmatprep.subr.mxu0 0.0
    %117 = vmatpush1.msra.mxu0 0.0
    %118 = vmatprep.subr.mxu0 0.0
    %119 = vmatpush1.msra.mxu0 0.0
    %120 = vmatprep.subr.mxu0 0.0
    %121 = vmatpush1.msra.mxu0 0.0
    %122 = vmatprep.mubr.f32.mxu0 0.0
    %123 = vmatmul.mubr.f32.gmra.mrb[0].mxu0 %v47
    %v124 = vpop.f32.mrb[0].mxu0
    %v125 = vadd.f32 %v28, %v124
    %v126 = vpop.f32.mrb[0].mxu0
    %127 = vmatprep.mubr.f32.mxu0 0.0
    %128 = vmatmul.mubr.f32.gmra.mrb[0].mxu0 %v50
    %v129 = vpop.f32.mrb[0].mxu0
    %v130 = vadd.f32 %v33, %v129
    %v131 = vpop.f32.mrb[0].mxu0
    %132 = vmatprep.mubr.f32.mxu0 0.0
    %133 = vmatmul.mubr.f32.gmra.mrb[0].mxu0 %v53
    %v134 = vpop.f32.mrb[0].mxu0
    %v135 = vadd.f32 %v38, %v134
    %v136 = vpop.f32.mrb[0].mxu0
    %137 = vmatprep.mubr.f32.mxu0 0.0
    %138 = vmatmul.mubr.f32.gmra.mrb[0].mxu0 %v56
    %v139 = vpop.f32.mrb[0].mxu0
    %v140 = vadd.f32 %v43, %v139
    %v141 = vpop.f32.mrb[0].mxu0
    %142 = vdwg.mxu0
    %v143 = vmax.f32 %v125, 0.0
    %v144 = vmax.f32 %v130, 0.0
    %v145 = vmax.f32 %v135, 0.0
    %v146 = vmax.f32 %v140, 0.0
    %v147 = vld [vmem:[%s1 + $0x20] sm:$0xff]
    %v148 = vld [vmem:[%s1 + $0x28] sm:$0xff]
    %v149 = vld [vmem:[%s1 + $0x30] sm:$0xff]
    %v150 = vld [vmem:[%s1 + $0x38] sm:$0xff]
    %151 = vset.pattern.permute.xlu0 1
    %152 = vperm.xlu0 %151, %v21
    %v153 = vpop.permute.xlu0 %152
    %155 = vset.pattern.permute.xlu0 1
    %156 = vperm.xlu0 %155, %v22
    %v157 = vpop.permute.xlu0 %156
    %159 = vset.pattern.permute.xlu0 1
    %160 = vperm.xlu0 %159, %v23
    %v161 = vpop.permute.xlu0 %160
    %163 = vset.pattern.permute.xlu0 1
    %164 = vperm.xlu0 %163, %v24
    %v165 = vpop.permute.xlu0 %164
    %vm167 = vcmask 261120
    %v169 = vsel %vm167, %v147, 0
    %v172 = vsel %vm167, %v148, 0
    %v175 = vsel %vm167, %v149, 0
    %v178 = vsel %vm167, %v150, 0
    %180 = vmatprep.subr.mxu0 0.0
    %181 = vmatpush1.msra.mxu0 %v143
    %182 = vmatprep.subr.mxu0 0.0
    %183 = vmatpush1.msra.mxu0 %v144
    %184 = vmatprep.subr.mxu0 0.0
    %185 = vmatpush1.msra.mxu0 %v145
    %186 = vmatprep.subr.mxu0 0.0
    %187 = vmatpush1.msra.mxu0 %v146
    %188 = vmatprep.subr.mxu0 0.0
    %189 = vmatpush1.msra.mxu0 0.0
    %190 = vmatprep.subr.mxu0 0.0
    %191 = vmatpush1.msra.mxu0 0.0
    %192 = vmatprep.subr.mxu0 0.0
    %193 = vmatpush1.msra.mxu0 0.0
    %194 = vmatprep.subr.mxu0 0.0
    %195 = vmatpush1.msra.mxu0 0.0
    %196 = vmatprep.subr.mxu0 0.0
    %197 = vmatpush1.msra.mxu0 0.0
    %198 = vmatprep.subr.mxu0 0.0
    %199 = vmatpush1.msra.mxu0 0.0
    %200 = vmatprep.subr.mxu0 0.0
    %201 = vmatpush1.msra.mxu0 0.0
    %202 = vmatprep.subr.mxu0 0.0
    %203 = vmatpush1.msra.mxu0 0.0
    %204 = vmatprep.subr.mxu0 0.0
    %205 = vmatpush1.msra.mxu0 0.0
    %206 = vmatprep.subr.mxu0 0.0
    %207 = vmatpush1.msra.mxu0 0.0
    %208 = vmatprep.subr.mxu0 0.0
    %209 = vmatpush1.msra.mxu0 0.0
    %210 = vmatprep.subr.mxu0 0.0
    %211 = vmatpush1.msra.mxu0 0.0
    %212 = vmatprep.subr.mxu0 0.0
    %213 = vmatpush1.msra.mxu0 0.0
    %214 = vmatprep.subr.mxu0 0.0
    %215 = vmatpush1.msra.mxu0 0.0
    %216 = vmatprep.subr.mxu0 0.0
    %217 = vmatpush1.msra.mxu0 0.0
    %218 = vmatprep.subr.mxu0 0.0
    %219 = vmatpush1.msra.mxu0 0.0
    %220 = vmatprep.subr.mxu0 0.0
    %221 = vmatpush1.msra.mxu0 0.0
    %222 = vmatprep.subr.mxu0 0.0
    %223 = vmatpush1.msra.mxu0 0.0
    %224 = vmatprep.subr.mxu0 0.0
    %225 = vmatpush1.msra.mxu0 0.0
    %226 = vmatprep.subr.mxu0 0.0
    %227 = vmatpush1.msra.mxu0 0.0
    %228 = vmatprep.subr.mxu0 0.0
    %229 = vmatpush1.msra.mxu0 0.0
    %230 = vmatprep.subr.mxu0 0.0
    %231 = vmatpush1.msra.mxu0 0.0
    %232 = vmatprep.subr.mxu0 0.0
    %233 = vmatpush1.msra.mxu0 0.0
    %234 = vmatprep.subr.mxu0 0.0
    %235 = vmatpush1.msra.mxu0 0.0
    %236 = vmatprep.subr.mxu0 0.0
    %237 = vmatpush1.msra.mxu0 0.0
    %238 = vmatprep.subr.mxu0 0.0
    %239 = vmatpush1.msra.mxu0 0.0
    %240 = vmatprep.subr.mxu0 0.0
    %241 = vmatpush1.msra.mxu0 0.0
    %242 = vmatprep.subr.mxu0 0.0
    %243 = vmatpush1.msra.mxu0 0.0
    %244 = vmatprep.mubr.f32.mxu0 0.0
    %245 = vmatmul.mubr.f32.gmra.mrb[0].mxu0 %v169
    %v246 = vpop.f32.mrb[0].mxu0
    %v247 = vadd.f32 %v153, %v246
    %v248 = vpop.f32.mrb[0].mxu0
    %249 = vmatprep.mubr.f32.mxu0 0.0
    %250 = vmatmul.mubr.f32.gmra.mrb[0].mxu0 %v172
    %v251 = vpop.f32.mrb[0].mxu0
    %v252 = vadd.f32 %v157, %v251
    %v253 = vpop.f32.mrb[0].mxu0
    %254 = vmatprep.mubr.f32.mxu0 0.0
    %255 = vmatmul.mubr.f32.gmra.mrb[0].mxu0 %v175
    %v256 = vpop.f32.mrb[0].mxu0
    %v257 = vadd.f32 %v161, %v256
    %v258 = vpop.f32.mrb[0].mxu0
    %259 = vmatprep.mubr.f32.mxu0 0.0
    %260 = vmatmul.mubr.f32.gmra.mrb[0].mxu0 %v178
    %v261 = vpop.f32.mrb[0].mxu0
    %v262 = vadd.f32 %v165, %v261
    %v263 = vpop.f32.mrb[0].mxu0
    %264 = vdwg.mxu0
    %v265 = vmax.f32 %v247, 0.0
    %v266 = vmax.f32 %v252, 0.0
    %v267 = vmax.f32 %v257, 0.0
    %v268 = vmax.f32 %v262, 0.0
    %v269 = vld [vmem:[%s1 + $0x40] sm:$0xff]
    %v270 = vld [vmem:[%s1 + $0x48] sm:$0xff]
    %v271 = vld [vmem:[%s1 + $0x50] sm:$0xff]
    %v272 = vld [vmem:[%s1 + $0x58] sm:$0xff]
    %273 = vset.pattern.permute.xlu0 2
    %274 = vperm.xlu0 %273, %v21
    %v275 = vpop.permute.xlu0 %274
    %277 = vset.pattern.permute.xlu0 2
    %278 = vperm.xlu0 %277, %v22
    %v279 = vpop.permute.xlu0 %278
    %281 = vset.pattern.permute.xlu0 2
    %282 = vperm.xlu0 %281, %v23
    %v283 = vpop.permute.xlu0 %282
    %285 = vset.pattern.permute.xlu0 2
    %286 = vperm.xlu0 %285, %v24
    %v287 = vpop.permute.xlu0 %286
    %v290 = vsel %vm167, %v269, 0
    %v293 = vsel %vm167, %v270, 0
    %v296 = vsel %vm167, %v271, 0
    %v299 = vsel %vm167, %v272, 0
    %301 = vmatprep.subr.mxu0 0.0
    %302 = vmatpush1.msra.mxu0 %v265
    %303 = vmatprep.subr.mxu0 0.0
    %304 = vmatpush1.msra.mxu0 %v266
    %305 = vmatprep.subr.mxu0 0.0
    %306 = vmatpush1.msra.mxu0 %v267
    %307 = vmatprep.subr.mxu0 0.0
    %308 = vmatpush1.msra.mxu0 %v268
    %309 = vmatprep.subr.mxu0 0.0
    %310 = vmatpush1.msra.mxu0 0.0
    %311 = vmatprep.subr.mxu0 0.0
    %312 = vmatpush1.msra.mxu0 0.0
    %313 = vmatprep.subr.mxu0 0.0
    %314 = vmatpush1.msra.mxu0 0.0
    %315 = vmatprep.subr.mxu0 0.0
    %316 = vmatpush1.msra.mxu0 0.0
    %317 = vmatprep.subr.mxu0 0.0
    %318 = vmatpush1.msra.mxu0 0.0
    %319 = vmatprep.subr.mxu0 0.0
    %320 = vmatpush1.msra.mxu0 0.0
    %321 = vmatprep.subr.mxu0 0.0
    %322 = vmatpush1.msra.mxu0 0.0
    %323 = vmatprep.subr.mxu0 0.0
    %324 = vmatpush1.msra.mxu0 0.0
    %325 = vmatprep.subr.mxu0 0.0
    %326 = vmatpush1.msra.mxu0 0.0
    %327 = vmatprep.subr.mxu0 0.0
    %328 = vmatpush1.msra.mxu0 0.0
    %329 = vmatprep.subr.mxu0 0.0
    %330 = vmatpush1.msra.mxu0 0.0
    %331 = vmatprep.subr.mxu0 0.0
    %332 = vmatpush1.msra.mxu0 0.0
    %333 = vmatprep.subr.mxu0 0.0
    %334 = vmatpush1.msra.mxu0 0.0
    %335 = vmatprep.subr.mxu0 0.0
    %336 = vmatpush1.msra.mxu0 0.0
    %337 = vmatprep.subr.mxu0 0.0
    %338 = vmatpush1.msra.mxu0 0.0
    %339 = vmatprep.subr.mxu0 0.0
    %340 = vmatpush1.msra.mxu0 0.0
    %341 = vmatprep.subr.mxu0 0.0
    %342 = vmatpush1.msra.mxu0 0.0
    %343 = vmatprep.subr.mxu0 0.0
    %344 = vmatpush1.msra.mxu0 0.0
    %345 = vmatprep.subr.mxu0 0.0
    %346 = vmatpush1.msra.mxu0 0.0
    %347 = vmatprep.subr.mxu0 0.0
    %348 = vmatpush1.msra.mxu0 0.0
    %349 = vmatprep.subr.mxu0 0.0
    %350 = vmatpush1.msra.mxu0 0.0
    %351 = vmatprep.subr.mxu0 0.0
    %352 = vmatpush1.msra.mxu0 0.0
    %353 = vmatprep.subr.mxu0 0.0
    %354 = vmatpush1.msra.mxu0 0.0
    %355 = vmatprep.subr.mxu0 0.0
    %356 = vmatpush1.msra.mxu0 0.0
    %357 = vmatprep.subr.mxu0 0.0
    %358 = vmatpush1.msra.mxu0 0.0
    %359 = vmatprep.subr.mxu0 0.0
    %360 = vmatpush1.msra.mxu0 0.0
    %361 = vmatprep.subr.mxu0 0.0
    %362 = vmatpush1.msra.mxu0 0.0
    %363 = vmatprep.subr.mxu0 0.0
    %364 = vmatpush1.msra.mxu0 0.0
    %365 = vmatprep.mubr.f32.mxu0 0.0
    %366 = vmatmul.mubr.f32.gmra.mrb[0].mxu0 %v290
    %v367 = vpop.f32.mrb[0].mxu0
    %v368 = vadd.f32 %v275, %v367
    %v369 = vpop.f32.mrb[0].mxu0
    %370 = vmatprep.mubr.f32.mxu0 0.0
    %371 = vmatmul.mubr.f32.gmra.mrb[0].mxu0 %v293
    %v372 = vpop.f32.mrb[0].mxu0
    %v373 = vadd.f32 %v279, %v372
    %v374 = vpop.f32.mrb[0].mxu0
    %375 = vmatprep.mubr.f32.mxu0 0.0
    %376 = vmatmul.mubr.f32.gmra.mrb[0].mxu0 %v296
    %v377 = vpop.f32.mrb[0].mxu0
    %v378 = vadd.f32 %v283, %v377
    %v379 = vpop.f32.mrb[0].mxu0
    %380 = vmatprep.mubr.f32.mxu0 0.0
    %381 = vmatmul.mubr.f32.gmra.mrb[0].mxu0 %v299
    %v382 = vpop.f32.mrb[0].mxu0
    %v383 = vadd.f32 %v287, %v382
    %v384 = vpop.f32.mrb[0].mxu0
    %385 = vdwg.mxu0
    %v386 = vmax.f32 %v368, 0.0
    %v387 = vmax.f32 %v373, 0.0
    %v388 = vmax.f32 %v378, 0.0
    %v389 = vmax.f32 %v383, 0.0
    %v390 = vld [vmem:[%s1 + $0x60] sm:$0xff]
    %v392 = vsel %vm167, %v390, 0
    %394 = vmatprep.subr.mxu0 0.0
    %395 = vmatpush1.msra.mxu0 %v386
    %396 = vmatprep.subr.mxu0 0.0
    %397 = vmatpush1.msra.mxu0 %v387
    %398 = vmatprep.subr.mxu0 0.0
    %399 = vmatpush1.msra.mxu0 %v388
    %400 = vmatprep.subr.mxu0 0.0
    %401 = vmatpush1.msra.mxu0 %v389
    %402 = vmatprep.subr.mxu0 0.0
    %403 = vmatpush1.msra.mxu0 0.0
    %404 = vmatprep.subr.mxu0 0.0
    %405 = vmatpush1.msra.mxu0 0.0
    %406 = vmatprep.subr.mxu0 0.0
    %407 = vmatpush1.msra.mxu0 0.0
    %408 = vmatprep.subr.mxu0 0.0
    %409 = vmatpush1.msra.mxu0 0.0
    %410 = vmatprep.subr.mxu0 0.0
    %411 = vmatpush1.msra.mxu0 0.0
    %412 = vmatprep.subr.mxu0 0.0
    %413 = vmatpush1.msra.mxu0 0.0
    %414 = vmatprep.subr.mxu0 0.0
    %415 = vmatpush1.msra.mxu0 0.0
    %416 = vmatprep.subr.mxu0 0.0
    %417 = vmatpush1.msra.mxu0 0.0
    %418 = vmatprep.subr.mxu0 0.0
    %419 = vmatpush1.msra.mxu0 0.0
    %420 = vmatprep.subr.mxu0 0.0
    %421 = vmatpush1.msra.mxu0 0.0
    %422 = vmatprep.subr.mxu0 0.0
    %423 = vmatpush1.msra.mxu0 0.0
    %424 = vmatprep.subr.mxu0 0.0
    %425 = vmatpush1.msra.mxu0 0.0
    %426 = vmatprep.subr.mxu0 0.0
    %427 = vmatpush1.msra.mxu0 0.0
    %428 = vmatprep.subr.mxu0 0.0
    %429 = vmatpush1.msra.mxu0 0.0
    %430 = vmatprep.subr.mxu0 0.0
    %431 = vmatpush1.msra.mxu0 0.0
    %432 = vmatprep.subr.mxu0 0.0
    %433 = vmatpush1.msra.mxu0 0.0
    %434 = vmatprep.subr.mxu0 0.0
    %435 = vmatpush1.msra.mxu0 0.0
    %436 = vmatprep.subr.mxu0 0.0
    %437 = vmatpush1.msra.mxu0 0.0
    %438 = vmatprep.subr.mxu0 0.0
    %439 = vmatpush1.msra.mxu0 0.0
    %440 = vmatprep.subr.mxu0 0.0
    %441 = vmatpush1.msra.mxu0 0.0
    %442 = vmatprep.subr.mxu0 0.0
    %443 = vmatpush1.msra.mxu0 0.0
    %444 = vmatprep.subr.mxu0 0.0
    %445 = vmatpush1.msra.mxu0 0.0
    %446 = vmatprep.subr.mxu0 0.0
    %447 = vmatpush1.msra.mxu0 0.0
    %448 = vmatprep.subr.mxu0 0.0
    %449 = vmatpush1.msra.mxu0 0.0
    %450 = vmatprep.subr.mxu0 0.0
    %451 = vmatpush1.msra.mxu0 0.0
    %452 = vmatprep.subr.mxu0 0.0
    %453 = vmatpush1.msra.mxu0 0.0
    %454 = vmatprep.subr.mxu0 0.0
    %455 = vmatpush1.msra.mxu0 0.0
    %456 = vmatprep.subr.mxu0 0.0
    %457 = vmatpush1.msra.mxu0 0.0
    %458 = vmatprep.mubr.f32.mxu0 0.0
    %459 = vmatmul.mubr.f32.gmra.mrb[0].mxu0 %v392
    %v460 = vpop.f32.mrb[0].mxu0
    %v461 = vadd.f32 0.0, %v460
    %v462 = vpop.f32.mrb[0].mxu0
    %463 = vdwg.mxu0
    %464 = vst [vmem:[#allocation2] sm:$0x1] %v461
    // Predicated region
    $region14: #{tpu_custom_call.1} parent=1 // pred_check
      _
    $region15: #{tpu_custom_call.1} parent=1 // pred_check_branch
      %466 = sbr.rel (0) target = $region17
    $region16: #{tpu_custom_call.1} parent=1 // pred_region
      %s468 = ssub.s32 16, 16
      %469 = vsyncadd [#allocation3], %s468
      %s471 = sshll.u32 [#allocation2], 4
      %s472 = int_to_ptr.vmem [resolvable:$true] %s471
      %474 = dma.vmem_to_hbm [thread:$0]  %s472, 16, %s3, [#allocation3]
    $region17: #{tpu_custom_call.1} parent=1 // pred_fallthru
      _
    // Predicated region
    $region18: #{tpu_custom_call.1} parent=1 // pred_check
      _
    $region19: #{tpu_custom_call.1} parent=1 // pred_check_branch
      %476 = sbr.rel (0) target = $region21
    $region20: #{tpu_custom_call.1} parent=1 // pred_region
      %477 = dma.done [#allocation3], 16
    $region21: #{tpu_custom_call.1} parent=1 // pred_fallthru
      _
    %478 = vsyncpa [#allocation3], 1

</llo_original>
